<compile_context>
chip_gen: v5e
topology: v5e:2x2
jax: 0.10.0
libtpu: 0.0.40
codegen_flags: <defaults>
</compile_context>

<pallas_src>
import functools

import jax
import jax.numpy as jnp
from jax.experimental import pallas as pl
from jax.experimental.pallas import tpu as pltpu


def _upblock_kernel(x_ref, w_ref, b_ref, o_ref, *maybe_stats, last, norm, use_mxu):
    # x_ref: (Nb, Cin, H*W)          input, spatial flattened on lanes
    # w_ref: (4*Cout, 2*Cin)         rows (a, b, co); cols (t, ci): t=0 -> kh=a, t=1 -> kh=a+2
    # b_ref: (4*Cout, 1)             conv bias, tiled over (a, b)
    # o_ref: (Nb, 4*Cout, (H+1)*W)   rows (a, b, co), lanes (q*W + j)
    # maybe_stats = (s_ref,) with s_ref (Nb, 4*Cout, 2) iff norm=True
    nb, cin, hw = x_ref.shape
    c4, hw1 = o_ref.shape[1], o_ref.shape[2]
    w_lanes = hw1 - hw                                  # = W
    s_ref = maybe_stats[0] if norm else None

    w_all = w_ref[...]                                  # (4*Cout, 2*Cin) f32
    bias = b_ref[...]                                   # (4*Cout, 1), broadcasts over lanes
    if use_mxu:
        w_mm = w_all.astype(jnp.bfloat16)               # bf16 MXU operand, f32 accumulate

    zpad = jnp.zeros((cin, w_lanes), jnp.float32)       # hoisted (not re-built per batch elem)

    for n in range(nb):                                 # static unroll over the batch block
        x = x_ref[n]                                    # (Cin, H*W)
        # x_a lane q*W+j -> x[ci, q, j]  (zero row q = H)     -- kh = a   tap
        # x_b lane q*W+j -> x[ci, q-1, j] (zero row q = 0)    -- kh = a+2 tap
        x_a = jnp.concatenate([x, zpad], axis=1)        # (Cin, (H+1)*W)
        x_b = jnp.concatenate([zpad, x], axis=1)        # (Cin, (H+1)*W)

        if use_mxu:
            xp = jnp.concatenate([x_a, x_b], axis=0)    # (2*Cin, (H+1)*W)
            z = jnp.dot(w_mm, xp.astype(jnp.bfloat16),
                        preferred_element_type=jnp.float32)        # (4*Cout, (H+1)*W)
        else:
            # Contraction depth 2*Cin is tiny: unrolled VPU broadcast-MAC (f32), no MXU.
            z = w_all[:, 0:1] * x_a[0:1, :]
            for k in range(1, cin):
                z = z + w_all[:, k:k + 1] * x_a[k:k + 1, :]
            for k in range(cin):
                z = z + w_all[:, cin + k:cin + k + 1] * x_b[k:k + 1, :]

        v = z + bias
        if last:
            y = jax.nn.sigmoid(v)                       # nn.Sigmoid (EUP)
        else:
            y = jnp.maximum(v, 0.2 * v)                 # nn.LeakyReLU(0.2)

        o_ref[n] = y                                    # single aligned, lane-dense store

        if norm:
            # Per-(a,b,co) partial sums for BatchNorm batch statistics. Every lane of y
            # is a real output pixel, so no masking is needed.
            s_ref[n, :, 0:1] = jnp.sum(y, axis=1, keepdims=True)
            s_ref[n, :, 1:2] = jnp.sum(y * y, axis=1, keepdims=True)


def upblock_forward(x_nchw, weight, bias, *, last=False, norm=False,
                    bn_gamma=None, bn_beta=None, eps=1e-5,
                    vmem_budget_bytes=8 << 20):
    N, Cin, H, W = x_nchw.shape
    Cout = weight.shape[1]
    C4, HW, HW1 = 4 * Cout, H * W, (H + 1) * W

    # NCHW -> (N, Cin, H*W): free reshape, no transpose.
    x_flat = x_nchw.reshape(N, Cin, HW).astype(jnp.float32)

    # weight (Cin, Cout, kh=4, kw=2) -> (4*Cout, 2*Cin): row (a, b, co), col (t, ci),
    # with kh = 2*t + a, kw = b.
    w5 = weight.reshape(Cin, Cout, 2, 2, 2).astype(jnp.float32)      # (ci, co, t, a, b)
    w_pack = jnp.transpose(w5, (3, 4, 1, 2, 0)).reshape(C4, 2 * Cin)
    b_col = jnp.tile(bias.astype(jnp.float32), 4).reshape(C4, 1)     # row (a,b,co) -> bias[co]

    # Batch block: as many batch elements per grid step as fit the VMEM budget
    # (fewer, larger lane-dense steps amortise the ~0.35us/step fixed overhead).
    per_elem = 4 * HW1 * (2 * (Cin + C4) + (2 * Cin + C4))           # rough f32 + double-buffer
    nb = max(1, min(N, vmem_budget_bytes // max(per_elem, 1)))
    while N % nb:
        nb -= 1
    grid = (N // nb,)

    use_mxu = (2 * Cin) > 16                                         # tiny depth -> VPU MAC
    kern = functools.partial(_upblock_kernel, last=last, norm=norm, use_mxu=use_mxu)

    out_shapes = [jax.ShapeDtypeStruct((N, C4, HW1), jnp.float32)]
    out_specs = [pl.BlockSpec((nb, C4, HW1), lambda i: (i, 0, 0))]
    if norm:
        out_shapes.append(jax.ShapeDtypeStruct((N, C4, 2), jnp.float32))
        out_specs.append(pl.BlockSpec((nb, C4, 2), lambda i: (i, 0, 0)))

    results = pl.pallas_call(
        kern,
        out_shape=tuple(out_shapes),
        grid_spec=pltpu.PrefetchScalarGridSpec(
            num_scalar_prefetch=0,
            grid=grid,
            in_specs=[
                pl.BlockSpec((nb, Cin, HW), lambda i: (i, 0, 0)),
                pl.BlockSpec((C4, 2 * Cin), lambda i: (0, 0)),       # fetched once
                pl.BlockSpec((C4, 1), lambda i: (0, 0)),             # fetched once
            ],
            out_specs=tuple(out_specs),
        ),
        compiler_params=pltpu.CompilerParams(
            dimension_semantics=("parallel",),
            vmem_limit_bytes=32 * 1024 * 1024),                      # v5e scoped default is 16 MiB
    )(x_flat, w_pack, b_col)

    out_flat = results[0]

    if norm:
        stats = results[1]
        # BatchNorm2d, training-mode semantics (batch statistics, biased variance), per
        # channel co over (n, a, b, q, j). Finished from in-kernel partial sums, so the
        # statistics need no extra HBM pass over the activation.
        count = N * 4 * HW1                                          # = N * (2H+2) * (2W)
        s = stats[:, :, 0].reshape(N, 4, Cout).sum(axis=(0, 1))
        ss = stats[:, :, 1].reshape(N, 4, Cout).sum(axis=(0, 1))
        mean = s / count
        var = ss / count - mean * mean
        g = jnp.ones((Cout,), jnp.float32) if bn_gamma is None else bn_gamma.astype(jnp.float32)
        be = jnp.zeros((Cout,), jnp.float32) if bn_beta is None else bn_beta.astype(jnp.float32)
        scale = g * jax.lax.rsqrt(var + eps)
        shift = be - mean * scale
        # Placed adjacent to the layout transform below so XLA fuses the scale/shift and
        # the NCHW transpose into one pass over the activation.
        out_flat = out_flat * jnp.tile(scale, 4)[None, :, None] + jnp.tile(shift, 4)[None, :, None]
        # TODO(synk): running_mean/running_var buffer updates are stateful and not returned.

    # Packed (n, (a, b, co), (q, j)) -> NCHW (n, co, 2q+a, 2j+b) in ONE transpose.
    # (Emitting NCHW directly from the kernel would make the lane dim 2*W (=32 here) and
    #  turn every store into a masked sub-128-lane store; keeping stores lane-dense and
    #  paying one fused wrapper transpose is cheaper at these widths.)
    y = out_flat.reshape(N, 2, 2, Cout, H + 1, W)
    y = jnp.transpose(y, (0, 3, 4, 1, 5, 2)).reshape(N, Cout, 2 * H + 2, 2 * W)
    return y


def upblock_reference(x_nchw, weight, bias, *, last=False, norm=False,
                      bn_gamma=None, bn_beta=None, eps=1e-5):
    """Pure-JAX reference: direct scatter form of ConvTranspose2d + act (+ BN)."""
    N, Cin, H, W = x_nchw.shape
    Cout = weight.shape[1]
    y = jnp.zeros((N, Cout, 2 * H + 2, 2 * W), jnp.float32)
    for kh in range(4):
        for kw in range(2):
            contrib = jnp.einsum('nchw,cd->ndhw', x_nchw, weight[:, :, kh, kw],
                                 precision=jax.lax.Precision.HIGHEST)
            y = y.at[:, :, kh:kh + 2 * H:2, kw:kw + 2 * W:2].add(contrib)
    y = y + bias[None, :, None, None]
    y = jax.nn.sigmoid(y) if last else jnp.where(y >= 0, y, 0.2 * y)
    if norm:
        mean = jnp.mean(y, axis=(0, 2, 3), keepdims=True)
        var = jnp.mean((y - mean) ** 2, axis=(0, 2, 3), keepdims=True)
        g = jnp.ones((Cout,), jnp.float32) if bn_gamma is None else bn_gamma
        b = jnp.zeros((Cout,), jnp.float32) if bn_beta is None else bn_beta
        y = (y - mean) * jax.lax.rsqrt(var + eps) * g[None, :, None, None] \
            + b[None, :, None, None]
    return y


if __name__ == "__main__":
    key = jax.random.PRNGKey(0)
    kx, kw, kb, kg, kb2, kx2, kw2, kb3 = jax.random.split(key, 8)

    # ---- Small shape (Cin=4 -> f32 VPU-MAC path), default + last/norm variants -------
    N, Cin, Cout, H, W = 2, 4, 8, 16, 16
    x = jax.random.normal(kx, (N, Cin, H, W), jnp.float32)
    # ConvTranspose2d params: weight (in_channel, out_channel, 4, 2), bias (out_channel,)
    weight = 0.1 * jax.random.normal(kw, (Cin, Cout, 4, 2), jnp.float32)
    bias = 0.1 * jax.random.normal(kb, (Cout,), jnp.float32)
    bn_gamma = 1.0 + 0.1 * jax.random.normal(kg, (Cout,), jnp.float32)
    bn_beta = 0.1 * jax.random.normal(kb2, (Cout,), jnp.float32)

    # Default UpBlock(in, out): LeakyReLU(0.2), norm=False.
    y = jax.block_until_ready(upblock_forward(x, weight, bias, last=False, norm=False))
    y_ref = upblock_reference(x, weight, bias, last=False, norm=False)
    assert y.shape == (N, Cout, 2 * H + 2, 2 * W), y.shape
    assert jnp.allclose(y, y_ref, atol=1e-3, rtol=1e-3), float(jnp.max(jnp.abs(y - y_ref)))

    # last=True (Sigmoid) + norm=True (affine BatchNorm2d with batch stats).
    y2 = jax.block_until_ready(upblock_forward(x, weight, bias, last=True, norm=True,
                                               bn_gamma=bn_gamma, bn_beta=bn_beta))
    y2_ref = upblock_reference(x, weight, bias, last=True, norm=True,
                               bn_gamma=bn_gamma, bn_beta=bn_beta)
    assert jnp.allclose(y2, y2_ref, atol=1e-3, rtol=1e-3), float(jnp.max(jnp.abs(y2 - y2_ref)))

    # ---- Larger channel count (Cin=32 -> bf16 MXU path with f32 accumulation) --------
    N2, Cin2, Cout2 = 2, 32, 16
    x_big = jax.random.normal(kx2, (N2, Cin2, H, W), jnp.float32)
    weight_big = 0.1 * jax.random.normal(kw2, (Cin2, Cout2, 4, 2), jnp.float32)
    bias_big = 0.1 * jax.random.normal(kb3, (Cout2,), jnp.float32)
    y3 = jax.block_until_ready(upblock_forward(x_big, weight_big, bias_big,
                                               last=False, norm=False))
    y3_ref = upblock_reference(x_big, weight_big, bias_big, last=False, norm=False)
    assert y3.shape == (N2, Cout2, 2 * H + 2, 2 * W), y3.shape
    # bf16 operand rounding vs f32 HIGHEST reference -> looser tolerance.
    assert jnp.allclose(y3, y3_ref, atol=3e-2, rtol=3e-2), float(jnp.max(jnp.abs(y3 - y3_ref)))

    print("KERNEL_OK")
</pallas_src>

<mosaic_0001>
module attributes {stable_mosaic.version = 11 : i64} {
  func.func @_upblock_kernel(%arg0: i32, %arg1: memref<2x4x256xf32, #tpu.memory_space<vmem>>, %arg2: memref<32x8xf32, #tpu.memory_space<vmem>>, %arg3: memref<32x1xf32, #tpu.memory_space<vmem>>, %arg4: memref<2x32x272xf32, #tpu.memory_space<vmem>>) attributes {dimension_semantics = [#tpu.dimension_semantics<parallel>], iteration_bounds = array<i64: 1>, scalar_prefetch = 0 : i64, scratch_operands = 0 : i64, tpu.core_type = #tpu.core_type<tc>, window_params = [{transform_indices = @transform_0, window_bounds = array<i64: 2, 4, 256>}, {pipeline_mode = #tpu.pipeline_mode<synchronous>, transform_indices = @transform_1, window_bounds = array<i64: 32, 8>}, {pipeline_mode = #tpu.pipeline_mode<synchronous>, transform_indices = @transform_2, window_bounds = array<i64: 32, 1>}, {transform_indices = @transform_3, window_bounds = array<i64: 2, 32, 272>}]} {
    %c0 = arith.constant 0 : index
    %c0_0 = arith.constant 0 : index
    %0 = vector.load %arg2[%c0, %c0_0] : memref<32x8xf32, #tpu.memory_space<vmem>>, vector<32x8xf32>
    %c0_1 = arith.constant 0 : index
    %c0_2 = arith.constant 0 : index
    %1 = vector.load %arg3[%c0_1, %c0_2] : memref<32x1xf32, #tpu.memory_space<vmem>>, vector<32x1xf32>
    %cst = arith.constant 0.000000e+00 : f32
    %2 = vector.broadcast %cst : f32 to vector<4x16xf32>
    %c0_3 = arith.constant 0 : index
    %c0_4 = arith.constant 0 : index
    %c0_5 = arith.constant 0 : index
    %3 = vector.load %arg1[%c0_3, %c0_4, %c0_5] : memref<2x4x256xf32, #tpu.memory_space<vmem>>, vector<1x4x256xf32>
    %4 = vector.shape_cast %3 : vector<1x4x256xf32> to vector<4x256xf32>
    %5 = tpu.concatenate %4, %2 in 1 : vector<4x256xf32>, vector<4x16xf32> -> vector<4x272xf32>
    %6 = tpu.concatenate %2, %4 in 1 : vector<4x16xf32>, vector<4x256xf32> -> vector<4x272xf32>
    %7 = vector.extract_strided_slice %0 {offsets = [0, 0], sizes = [32, 1], strides = [1, 1]} : vector<32x8xf32> to vector<32x1xf32>
    %8 = vector.extract_strided_slice %5 {offsets = [0, 0], sizes = [1, 272], strides = [1, 1]} : vector<4x272xf32> to vector<1x272xf32>
    %9 = vector.broadcast %7 : vector<32x1xf32> to vector<32x272xf32>
    %10 = vector.broadcast %8 : vector<1x272xf32> to vector<32x272xf32>
    %11 = arith.mulf %9, %10 : vector<32x272xf32>
    %12 = vector.extract_strided_slice %0 {offsets = [0, 1], sizes = [32, 1], strides = [1, 1]} : vector<32x8xf32> to vector<32x1xf32>
    %13 = vector.extract_strided_slice %5 {offsets = [1, 0], sizes = [1, 272], strides = [1, 1]} : vector<4x272xf32> to vector<1x272xf32>
    %14 = vector.broadcast %12 : vector<32x1xf32> to vector<32x272xf32>
    %15 = vector.broadcast %13 : vector<1x272xf32> to vector<32x272xf32>
    %16 = arith.mulf %14, %15 : vector<32x272xf32>
    %17 = arith.addf %11, %16 : vector<32x272xf32>
    %18 = vector.extract_strided_slice %0 {offsets = [0, 2], sizes = [32, 1], strides = [1, 1]} : vector<32x8xf32> to vector<32x1xf32>
    %19 = vector.extract_strided_slice %5 {offsets = [2, 0], sizes = [1, 272], strides = [1, 1]} : vector<4x272xf32> to vector<1x272xf32>
    %20 = vector.broadcast %18 : vector<32x1xf32> to vector<32x272xf32>
    %21 = vector.broadcast %19 : vector<1x272xf32> to vector<32x272xf32>
    %22 = arith.mulf %20, %21 : vector<32x272xf32>
    %23 = arith.addf %17, %22 : vector<32x272xf32>
    %24 = vector.extract_strided_slice %0 {offsets = [0, 3], sizes = [32, 1], strides = [1, 1]} : vector<32x8xf32> to vector<32x1xf32>
    %25 = vector.extract_strided_slice %5 {offsets = [3, 0], sizes = [1, 272], strides = [1, 1]} : vector<4x272xf32> to vector<1x272xf32>
    %26 = vector.broadcast %24 : vector<32x1xf32> to vector<32x272xf32>
    %27 = vector.broadcast %25 : vector<1x272xf32> to vector<32x272xf32>
    %28 = arith.mulf %26, %27 : vector<32x272xf32>
    %29 = arith.addf %23, %28 : vector<32x272xf32>
    %30 = vector.extract_strided_slice %0 {offsets = [0, 4], sizes = [32, 1], strides = [1, 1]} : vector<32x8xf32> to vector<32x1xf32>
    %31 = vector.extract_strided_slice %6 {offsets = [0, 0], sizes = [1, 272], strides = [1, 1]} : vector<4x272xf32> to vector<1x272xf32>
    %32 = vector.broadcast %30 : vector<32x1xf32> to vector<32x272xf32>
    %33 = vector.broadcast %31 : vector<1x272xf32> to vector<32x272xf32>
    %34 = arith.mulf %32, %33 : vector<32x272xf32>
    %35 = arith.addf %29, %34 : vector<32x272xf32>
    %36 = vector.extract_strided_slice %0 {offsets = [0, 5], sizes = [32, 1], strides = [1, 1]} : vector<32x8xf32> to vector<32x1xf32>
    %37 = vector.extract_strided_slice %6 {offsets = [1, 0], sizes = [1, 272], strides = [1, 1]} : vector<4x272xf32> to vector<1x272xf32>
    %38 = vector.broadcast %36 : vector<32x1xf32> to vector<32x272xf32>
    %39 = vector.broadcast %37 : vector<1x272xf32> to vector<32x272xf32>
    %40 = arith.mulf %38, %39 : vector<32x272xf32>
    %41 = arith.addf %35, %40 : vector<32x272xf32>
    %42 = vector.extract_strided_slice %0 {offsets = [0, 6], sizes = [32, 1], strides = [1, 1]} : vector<32x8xf32> to vector<32x1xf32>
    %43 = vector.extract_strided_slice %6 {offsets = [2, 0], sizes = [1, 272], strides = [1, 1]} : vector<4x272xf32> to vector<1x272xf32>
    %44 = vector.broadcast %42 : vector<32x1xf32> to vector<32x272xf32>
    %45 = vector.broadcast %43 : vector<1x272xf32> to vector<32x272xf32>
    %46 = arith.mulf %44, %45 : vector<32x272xf32>
    %47 = arith.addf %41, %46 : vector<32x272xf32>
    %48 = vector.extract_strided_slice %0 {offsets = [0, 7], sizes = [32, 1], strides = [1, 1]} : vector<32x8xf32> to vector<32x1xf32>
    %49 = vector.extract_strided_slice %6 {offsets = [3, 0], sizes = [1, 272], strides = [1, 1]} : vector<4x272xf32> to vector<1x272xf32>
    %50 = vector.broadcast %48 : vector<32x1xf32> to vector<32x272xf32>
    %51 = vector.broadcast %49 : vector<1x272xf32> to vector<32x272xf32>
    %52 = arith.mulf %50, %51 : vector<32x272xf32>
    %53 = arith.addf %47, %52 : vector<32x272xf32>
    %54 = vector.broadcast %1 : vector<32x1xf32> to vector<32x272xf32>
    %55 = arith.addf %53, %54 : vector<32x272xf32>
    %cst_6 = arith.constant 2.000000e-01 : f32
    %56 = vector.broadcast %cst_6 : f32 to vector<32x272xf32>
    %57 = arith.mulf %56, %55 : vector<32x272xf32>
    %58 = arith.maximumf %55, %57 : vector<32x272xf32>
    %c0_7 = arith.constant 0 : index
    %c0_8 = arith.constant 0 : index
    %c0_9 = arith.constant 0 : index
    %59 = vector.load %arg4[%c0_7, %c0_8, %c0_9] : memref<2x32x272xf32, #tpu.memory_space<vmem>>, vector<1x32x272xf32>
    %60 = vector.shape_cast %59 : vector<1x32x272xf32> to vector<32x272xf32>
    %61 = vector.shape_cast %58 : vector<32x272xf32> to vector<1x32x272xf32>
    tpu.vector_store %arg4[%c0_7, %c0_8, %c0_9], %61 {strides = array<i32>} : memref<2x32x272xf32, #tpu.memory_space<vmem>>, vector<1x32x272xf32>,
    %c1 = arith.constant 1 : index
    %c0_10 = arith.constant 0 : index
    %c0_11 = arith.constant 0 : index
    %62 = vector.load %arg1[%c1, %c0_10, %c0_11] : memref<2x4x256xf32, #tpu.memory_space<vmem>>, vector<1x4x256xf32>
    %63 = vector.shape_cast %62 : vector<1x4x256xf32> to vector<4x256xf32>
    %64 = tpu.concatenate %63, %2 in 1 : vector<4x256xf32>, vector<4x16xf32> -> vector<4x272xf32>
    %65 = tpu.concatenate %2, %63 in 1 : vector<4x16xf32>, vector<4x256xf32> -> vector<4x272xf32>
    %66 = vector.extract_strided_slice %0 {offsets = [0, 0], sizes = [32, 1], strides = [1, 1]} : vector<32x8xf32> to vector<32x1xf32>
    %67 = vector.extract_strided_slice %64 {offsets = [0, 0], sizes = [1, 272], strides = [1, 1]} : vector<4x272xf32> to vector<1x272xf32>
    %68 = vector.broadcast %66 : vector<32x1xf32> to vector<32x272xf32>
    %69 = vector.broadcast %67 : vector<1x272xf32> to vector<32x272xf32>
    %70 = arith.mulf %68, %69 : vector<32x272xf32>
    %71 = vector.extract_strided_slice %0 {offsets = [0, 1], sizes = [32, 1], strides = [1, 1]} : vector<32x8xf32> to vector<32x1xf32>
    %72 = vector.extract_strided_slice %64 {offsets = [1, 0], sizes = [1, 272], strides = [1, 1]} : vector<4x272xf32> to vector<1x272xf32>
    %73 = vector.broadcast %71 : vector<32x1xf32> to vector<32x272xf32>
    %74 = vector.broadcast %72 : vector<1x272xf32> to vector<32x272xf32>
    %75 = arith.mulf %73, %74 : vector<32x272xf32>
    %76 = arith.addf %70, %75 : vector<32x272xf32>
    %77 = vector.extract_strided_slice %0 {offsets = [0, 2], sizes = [32, 1], strides = [1, 1]} : vector<32x8xf32> to vector<32x1xf32>
    %78 = vector.extract_strided_slice %64 {offsets = [2, 0], sizes = [1, 272], strides = [1, 1]} : vector<4x272xf32> to vector<1x272xf32>
    %79 = vector.broadcast %77 : vector<32x1xf32> to vector<32x272xf32>
    %80 = vector.broadcast %78 : vector<1x272xf32> to vector<32x272xf32>
    %81 = arith.mulf %79, %80 : vector<32x272xf32>
    %82 = arith.addf %76, %81 : vector<32x272xf32>
    %83 = vector.extract_strided_slice %0 {offsets = [0, 3], sizes = [32, 1], strides = [1, 1]} : vector<32x8xf32> to vector<32x1xf32>
    %84 = vector.extract_strided_slice %64 {offsets = [3, 0], sizes = [1, 272], strides = [1, 1]} : vector<4x272xf32> to vector<1x272xf32>
    %85 = vector.broadcast %83 : vector<32x1xf32> to vector<32x272xf32>
    %86 = vector.broadcast %84 : vector<1x272xf32> to vector<32x272xf32>
    %87 = arith.mulf %85, %86 : vector<32x272xf32>
    %88 = arith.addf %82, %87 : vector<32x272xf32>
    %89 = vector.extract_strided_slice %0 {offsets = [0, 4], sizes = [32, 1], strides = [1, 1]} : vector<32x8xf32> to vector<32x1xf32>
    %90 = vector.extract_strided_slice %65 {offsets = [0, 0], sizes = [1, 272], strides = [1, 1]} : vector<4x272xf32> to vector<1x272xf32>
    %91 = vector.broadcast %89 : vector<32x1xf32> to vector<32x272xf32>
    %92 = vector.broadcast %90 : vector<1x272xf32> to vector<32x272xf32>
    %93 = arith.mulf %91, %92 : vector<32x272xf32>
    %94 = arith.addf %88, %93 : vector<32x272xf32>
    %95 = vector.extract_strided_slice %0 {offsets = [0, 5], sizes = [32, 1], strides = [1, 1]} : vector<32x8xf32> to vector<32x1xf32>
    %96 = vector.extract_strided_slice %65 {offsets = [1, 0], sizes = [1, 272], strides = [1, 1]} : vector<4x272xf32> to vector<1x272xf32>
    %97 = vector.broadcast %95 : vector<32x1xf32> to vector<32x272xf32>
    %98 = vector.broadcast %96 : vector<1x272xf32> to vector<32x272xf32>
    %99 = arith.mulf %97, %98 : vector<32x272xf32>
    %100 = arith.addf %94, %99 : vector<32x272xf32>
    %101 = vector.extract_strided_slice %0 {offsets = [0, 6], sizes = [32, 1], strides = [1, 1]} : vector<32x8xf32> to vector<32x1xf32>
    %102 = vector.extract_strided_slice %65 {offsets = [2, 0], sizes = [1, 272], strides = [1, 1]} : vector<4x272xf32> to vector<1x272xf32>
    %103 = vector.broadcast %101 : vector<32x1xf32> to vector<32x272xf32>
    %104 = vector.broadcast %102 : vector<1x272xf32> to vector<32x272xf32>
    %105 = arith.mulf %103, %104 : vector<32x272xf32>
    %106 = arith.addf %100, %105 : vector<32x272xf32>
    %107 = vector.extract_strided_slice %0 {offsets = [0, 7], sizes = [32, 1], strides = [1, 1]} : vector<32x8xf32> to vector<32x1xf32>
    %108 = vector.extract_strided_slice %65 {offsets = [3, 0], sizes = [1, 272], strides = [1, 1]} : vector<4x272xf32> to vector<1x272xf32>
    %109 = vector.broadcast %107 : vector<32x1xf32> to vector<32x272xf32>
    %110 = vector.broadcast %108 : vector<1x272xf32> to vector<32x272xf32>
    %111 = arith.mulf %109, %110 : vector<32x272xf32>
    %112 = arith.addf %106, %111 : vector<32x272xf32>
    %113 = vector.broadcast %1 : vector<32x1xf32> to vector<32x272xf32>
    %114 = arith.addf %112, %113 : vector<32x272xf32>
    %cst_12 = arith.constant 2.000000e-01 : f32
    %115 = vector.broadcast %cst_12 : f32 to vector<32x272xf32>
    %116 = arith.mulf %115, %114 : vector<32x272xf32>
    %117 = arith.maximumf %114, %116 : vector<32x272xf32>
    %c1_13 = arith.constant 1 : index
    %c0_14 = arith.constant 0 : index
    %c0_15 = arith.constant 0 : index
    %118 = vector.load %arg4[%c1_13, %c0_14, %c0_15] : memref<2x32x272xf32, #tpu.memory_space<vmem>>, vector<1x32x272xf32>
    %119 = vector.shape_cast %118 : vector<1x32x272xf32> to vector<32x272xf32>
    %120 = vector.shape_cast %117 : vector<32x272xf32> to vector<1x32x272xf32>
    tpu.vector_store %arg4[%c1_13, %c0_14, %c0_15], %120 {strides = array<i32>} : memref<2x32x272xf32, #tpu.memory_space<vmem>>, vector<1x32x272xf32>,
    return
  }
  func.func @transform_0(%arg0: i32) -> (i32, i32, i32) {
    %c0_i32 = arith.constant 0 : i32
    %c0_i32_0 = arith.constant 0 : i32
    %c0_i32_1 = arith.constant 0 : i32
    return %arg0, %c0_i32, %c0_i32_0 : i32, i32, i32
  }
  func.func @transform_1(%arg0: i32) -> (i32, i32) {
    %c0_i32 = arith.constant 0 : i32
    %c0_i32_0 = arith.constant 0 : i32
    %c0_i32_1 = arith.constant 0 : i32
    return %c0_i32, %c0_i32_0 : i32, i32
  }
  func.func @transform_2(%arg0: i32) -> (i32, i32) {
    %c0_i32 = arith.constant 0 : i32
    %c0_i32_0 = arith.constant 0 : i32
    %c0_i32_1 = arith.constant 0 : i32
    return %c0_i32, %c0_i32_0 : i32, i32
  }
  func.func @transform_3(%arg0: i32) -> (i32, i32, i32) {
    %c0_i32 = arith.constant 0 : i32
    %c0_i32_0 = arith.constant 0 : i32
    %c0_i32_1 = arith.constant 0 : i32
    return %arg0, %c0_i32, %c0_i32_0 : i32, i32, i32
  }
}

</mosaic_0001>

<llo_original>
// kernel: tpu_custom_call.1
$region0: #{tpu_custom_call.1}
  #allocation0 [shape = 'u32[]', space=smem, size = 0x4, offset = 0x4, fixed_abs, tag = 'smem constant byte address 0x4 - core index']
  #allocation1 [shape = 'u32[72,128]{1,0:T(1,128)}', space=vmem, size = 0x9000, scoped, tag = 'internal scratch']
  %s0 = inlined_call_operand.vmem [shape: f32[2,4,256], index: 0, kind: input, shape index: {}]
  %s1 = inlined_call_operand.vmem [shape: f32[32,8], index: 1, kind: input, shape index: {}]
  %s2 = inlined_call_operand.vmem [shape: f32[32,1], index: 2, kind: input, shape index: {}]
  %s3 = inlined_call_operand.hbm [shape: f32[2,32,272], index: 3, kind: output, shape index: {}]
  %s4 = sld [smem:[#allocation0]]
  $region22: #{tpu_custom_call.1} parent=0
    _
  %s6 = ssub.s32 1, %s4
  %s7 = scalar_select 0, %s6, %s4
  $region1: #{tpu_custom_call.1} parent=0
    #allocation2 [shape = 'u8[98304]{0}', space=vmem, size = 0x18000, scoped, tag = 'output window, operand 0, single buffered']
    #allocation3 [shape = 's32[1]{0}', space=sflag, size = 0x4, scoped, tag = 'scoped memory for tpu_custom_call.1']
    %8 = vsyncpa [#allocation3], 0
    // Predicated region
    $region2: #{tpu_custom_call.1} parent=1 // pred_check
      _
    $region3: #{tpu_custom_call.1} parent=1 // pred_check_branch
      %10 = sbr.rel (0) target = $region5
    $region4: #{tpu_custom_call.1} parent=1 // pred_region
      _
    $region5: #{tpu_custom_call.1} parent=1 // pred_fallthru
      _
    // Predicated region
    $region6: #{tpu_custom_call.1} parent=1 // pred_check
      _
    $region7: #{tpu_custom_call.1} parent=1 // pred_check_branch
      %12 = sbr.rel (0) target = $region9
    $region8: #{tpu_custom_call.1} parent=1 // pred_region
      _
    $region9: #{tpu_custom_call.1} parent=1 // pred_fallthru
      _
    // Predicated region
    $region10: #{tpu_custom_call.1} parent=1 // pred_check
      _
    $region11: #{tpu_custom_call.1} parent=1 // pred_check_branch
      %14 = sbr.rel (0) target = $region13
    $region12: #{tpu_custom_call.1} parent=1 // pred_region
      _
    $region13: #{tpu_custom_call.1} parent=1 // pred_fallthru
      _
    %v15 = vld [vmem:[%s1] sm:$0xff]
    %v16 = vld [vmem:[%s1 + $0x8] sm:$0xff]
    %v17 = vld [vmem:[%s1 + $0x10] sm:$0xff]
    %v18 = vld [vmem:[%s1 + $0x18] sm:$0xff]
    %v19 = vld [vmem:[%s2] sm:$0xff]
    %v20 = vld [vmem:[%s2 + $0x8] sm:$0xff]
    %v21 = vld [vmem:[%s2 + $0x10] sm:$0xff]
    %v22 = vld [vmem:[%s2 + $0x18] sm:$0xff]
    %v23 = vld [vmem:[%s0] sm:$0xff]
    %25 = vst [vmem:[#allocation1] ss:$2 sm:$0xff] %v23
    %v26 = vld.sshfl [vmem:[#allocation1] sm:$0xff pattern:$0x75316420]
    %v27 = vld.sshfl [vmem:[#allocation1 + $0x8] sm:$0xff pattern:$0x75316420]
    %30 = vst [vmem:[#allocation1] ss:$2 sm:$0xff] %v23
    %v31 = vld.sshfl [vmem:[#allocation1] sm:$0xff pattern:$0x75316420]
    %v32 = vld.sshfl [vmem:[#allocation1 + $0x8] sm:$0xff pattern:$0x75316420]
    %33 = vrot.lane.b32.xlu0 %v31, 16
    %v34 = vpop.permute.xlu0 %33
    %35 = vrot.lane.b32.xlu0 %v32, 16
    %v36 = vpop.permute.xlu0 %35
    %vm37 = vcmask 130048
    %v38 = vsel %vm37, %v34, %v36
    %v42 = vsel %vm37, 0.0, %v34
    %44 = vset.pattern.permute.xlu0 0
    %45 = vperm.xlu0 %44, %v15
    %v46 = vpop.permute.xlu0 %45
    %49 = vset.pattern.permute.xlu0 0
    %50 = vperm.xlu0 %49, %v16
    %v51 = vpop.permute.xlu0 %50
    %54 = vset.pattern.permute.xlu0 0
    %55 = vperm.xlu0 %54, %v17
    %v56 = vpop.permute.xlu0 %55
    %59 = vset.pattern.permute.xlu0 0
    %60 = vperm.xlu0 %59, %v18
    %v61 = vpop.permute.xlu0 %60
    %v63 = vperm.slane %v26, 0
    %v64 = vperm.slane %v27, 0
    %v65 = vperm.slane 0.0, 0
    %v66 = vmul.f32 %v46, %v63
    %v67 = vmul.f32 %v46, %v64
    %v68 = vmul.f32 %v46, %v65
    %v69 = vmul.f32 %v51, %v63
    %v70 = vmul.f32 %v51, %v64
    %v71 = vmul.f32 %v51, %v65
    %v72 = vmul.f32 %v56, %v63
    %v73 = vmul.f32 %v56, %v64
    %v74 = vmul.f32 %v56, %v65
    %v75 = vmul.f32 %v61, %v63
    %v76 = vmul.f32 %v61, %v64
    %v77 = vmul.f32 %v61, %v65
    %78 = vset.pattern.permute.xlu0 1
    %79 = vperm.xlu0 %78, %v15
    %v80 = vpop.permute.xlu0 %79
    %82 = vset.pattern.permute.xlu0 1
    %83 = vperm.xlu0 %82, %v16
    %v84 = vpop.permute.xlu0 %83
    %86 = vset.pattern.permute.xlu0 1
    %87 = vperm.xlu0 %86, %v17
    %v88 = vpop.permute.xlu0 %87
    %90 = vset.pattern.permute.xlu0 1
    %91 = vperm.xlu0 %90, %v18
    %v92 = vpop.permute.xlu0 %91
    %v94 = vperm.slane %v26, 1
    %v95 = vperm.slane %v27, 1
    %v96 = vperm.slane 0.0, 1
    %v97 = vmul.f32 %v80, %v94
    %v98 = vmul.f32 %v80, %v95
    %v99 = vmul.f32 %v80, %v96
    %v100 = vmul.f32 %v84, %v94
    %v101 = vmul.f32 %v84, %v95
    %v102 = vmul.f32 %v84, %v96
    %v103 = vmul.f32 %v88, %v94
    %v104 = vmul.f32 %v88, %v95
    %v105 = vmul.f32 %v88, %v96
    %v106 = vmul.f32 %v92, %v94
    %v107 = vmul.f32 %v92, %v95
    %v108 = vmul.f32 %v92, %v96
    %v109 = vadd.f32 %v66, %v97
    %v110 = vadd.f32 %v67, %v98
    %v111 = vadd.f32 %v68, %v99
    %v112 = vadd.f32 %v69, %v100
    %v113 = vadd.f32 %v70, %v101
    %v114 = vadd.f32 %v71, %v102
    %v115 = vadd.f32 %v72, %v103
    %v116 = vadd.f32 %v73, %v104
    %v117 = vadd.f32 %v74, %v105
    %v118 = vadd.f32 %v75, %v106
    %v119 = vadd.f32 %v76, %v107
    %v120 = vadd.f32 %v77, %v108
    %121 = vset.pattern.permute.xlu0 2
    %122 = vperm.xlu0 %121, %v15
    %v123 = vpop.permute.xlu0 %122
    %125 = vset.pattern.permute.xlu0 2
    %126 = vperm.xlu0 %125, %v16
    %v127 = vpop.permute.xlu0 %126
    %129 = vset.pattern.permute.xlu0 2
    %130 = vperm.xlu0 %129, %v17
    %v131 = vpop.permute.xlu0 %130
    %133 = vset.pattern.permute.xlu0 2
    %134 = vperm.xlu0 %133, %v18
    %v135 = vpop.permute.xlu0 %134
    %v137 = vperm.slane %v26, 2
    %v138 = vperm.slane %v27, 2
    %v139 = vperm.slane 0.0, 2
    %v140 = vmul.f32 %v123, %v137
    %v141 = vmul.f32 %v123, %v138
    %v142 = vmul.f32 %v123, %v139
    %v143 = vmul.f32 %v127, %v137
    %v144 = vmul.f32 %v127, %v138
    %v145 = vmul.f32 %v127, %v139
    %v146 = vmul.f32 %v131, %v137
    %v147 = vmul.f32 %v131, %v138
    %v148 = vmul.f32 %v131, %v139
    %v149 = vmul.f32 %v135, %v137
    %v150 = vmul.f32 %v135, %v138
    %v151 = vmul.f32 %v135, %v139
    %v152 = vadd.f32 %v109, %v140
    %v153 = vadd.f32 %v110, %v141
    %v154 = vadd.f32 %v111, %v142
    %v155 = vadd.f32 %v112, %v143
    %v156 = vadd.f32 %v113, %v144
    %v157 = vadd.f32 %v114, %v145
    %v158 = vadd.f32 %v115, %v146
    %v159 = vadd.f32 %v116, %v147
    %v160 = vadd.f32 %v117, %v148
    %v161 = vadd.f32 %v118, %v149
    %v162 = vadd.f32 %v119, %v150
    %v163 = vadd.f32 %v120, %v151
    %164 = vset.pattern.permute.xlu0 3
    %165 = vperm.xlu0 %164, %v15
    %v166 = vpop.permute.xlu0 %165
    %168 = vset.pattern.permute.xlu0 3
    %169 = vperm.xlu0 %168, %v16
    %v170 = vpop.permute.xlu0 %169
    %172 = vset.pattern.permute.xlu0 3
    %173 = vperm.xlu0 %172, %v17
    %v174 = vpop.permute.xlu0 %173
    %176 = vset.pattern.permute.xlu0 3
    %177 = vperm.xlu0 %176, %v18
    %v178 = vpop.permute.xlu0 %177
    %v180 = vperm.slane %v26, 3
    %v181 = vperm.slane %v27, 3
    %v182 = vperm.slane 0.0, 3
    %v183 = vmul.f32 %v166, %v180
    %v184 = vmul.f32 %v166, %v181
    %v185 = vmul.f32 %v166, %v182
    %v186 = vmul.f32 %v170, %v180
    %v187 = vmul.f32 %v170, %v181
    %v188 = vmul.f32 %v170, %v182
    %v189 = vmul.f32 %v174, %v180
    %v190 = vmul.f32 %v174, %v181
    %v191 = vmul.f32 %v174, %v182
    %v192 = vmul.f32 %v178, %v180
    %v193 = vmul.f32 %v178, %v181
    %v194 = vmul.f32 %v178, %v182
    %v195 = vadd.f32 %v152, %v183
    %v196 = vadd.f32 %v153, %v184
    %v197 = vadd.f32 %v154, %v185
    %v198 = vadd.f32 %v155, %v186
    %v199 = vadd.f32 %v156, %v187
    %v200 = vadd.f32 %v157, %v188
    %v201 = vadd.f32 %v158, %v189
    %v202 = vadd.f32 %v159, %v190
    %v203 = vadd.f32 %v160, %v191
    %v204 = vadd.f32 %v161, %v192
    %v205 = vadd.f32 %v162, %v193
    %v206 = vadd.f32 %v163, %v194
    %207 = vset.pattern.permute.xlu0 4
    %208 = vperm.xlu0 %207, %v15
    %v209 = vpop.permute.xlu0 %208
    %211 = vset.pattern.permute.xlu0 4
    %212 = vperm.xlu0 %211, %v16
    %v213 = vpop.permute.xlu0 %212
    %215 = vset.pattern.permute.xlu0 4
    %216 = vperm.xlu0 %215, %v17
    %v217 = vpop.permute.xlu0 %216
    %219 = vset.pattern.permute.xlu0 4
    %220 = vperm.xlu0 %219, %v18
    %v221 = vpop.permute.xlu0 %220
    %v223 = vperm.slane %v42, 0
    %v224 = vperm.slane %v38, 0
    %v225 = vperm.slane %v36, 0
    %v226 = vmul.f32 %v209, %v223
    %v227 = vmul.f32 %v209, %v224
    %v228 = vmul.f32 %v209, %v225
    %v229 = vmul.f32 %v213, %v223
    %v230 = vmul.f32 %v213, %v224
    %v231 = vmul.f32 %v213, %v225
    %v232 = vmul.f32 %v217, %v223
    %v233 = vmul.f32 %v217, %v224
    %v234 = vmul.f32 %v217, %v225
    %v235 = vmul.f32 %v221, %v223
    %v236 = vmul.f32 %v221, %v224
    %v237 = vmul.f32 %v221, %v225
    %v238 = vadd.f32 %v195, %v226
    %v239 = vadd.f32 %v196, %v227
    %v240 = vadd.f32 %v197, %v228
    %v241 = vadd.f32 %v198, %v229
    %v242 = vadd.f32 %v199, %v230
    %v243 = vadd.f32 %v200, %v231
    %v244 = vadd.f32 %v201, %v232
    %v245 = vadd.f32 %v202, %v233
    %v246 = vadd.f32 %v203, %v234
    %v247 = vadd.f32 %v204, %v235
    %v248 = vadd.f32 %v205, %v236
    %v249 = vadd.f32 %v206, %v237
    %250 = vset.pattern.permute.xlu0 5
    %251 = vperm.xlu0 %250, %v15
    %v252 = vpop.permute.xlu0 %251
    %254 = vset.pattern.permute.xlu0 5
    %255 = vperm.xlu0 %254, %v16
    %v256 = vpop.permute.xlu0 %255
    %258 = vset.pattern.permute.xlu0 5
    %259 = vperm.xlu0 %258, %v17
    %v260 = vpop.permute.xlu0 %259
    %262 = vset.pattern.permute.xlu0 5
    %263 = vperm.xlu0 %262, %v18
    %v264 = vpop.permute.xlu0 %263
    %v266 = vperm.slane %v42, 1
    %v267 = vperm.slane %v38, 1
    %v268 = vperm.slane %v36, 1
    %v269 = vmul.f32 %v252, %v266
    %v270 = vmul.f32 %v252, %v267
    %v271 = vmul.f32 %v252, %v268
    %v272 = vmul.f32 %v256, %v266
    %v273 = vmul.f32 %v256, %v267
    %v274 = vmul.f32 %v256, %v268
    %v275 = vmul.f32 %v260, %v266
    %v276 = vmul.f32 %v260, %v267
    %v277 = vmul.f32 %v260, %v268
    %v278 = vmul.f32 %v264, %v266
    %v279 = vmul.f32 %v264, %v267
    %v280 = vmul.f32 %v264, %v268
    %v281 = vadd.f32 %v238, %v269
    %v282 = vadd.f32 %v239, %v270
    %v283 = vadd.f32 %v240, %v271
    %v284 = vadd.f32 %v241, %v272
    %v285 = vadd.f32 %v242, %v273
    %v286 = vadd.f32 %v243, %v274
    %v287 = vadd.f32 %v244, %v275
    %v288 = vadd.f32 %v245, %v276
    %v289 = vadd.f32 %v246, %v277
    %v290 = vadd.f32 %v247, %v278
    %v291 = vadd.f32 %v248, %v279
    %v292 = vadd.f32 %v249, %v280
    %293 = vset.pattern.permute.xlu0 6
    %294 = vperm.xlu0 %293, %v15
    %v295 = vpop.permute.xlu0 %294
    %297 = vset.pattern.permute.xlu0 6
    %298 = vperm.xlu0 %297, %v16
    %v299 = vpop.permute.xlu0 %298
    %301 = vset.pattern.permute.xlu0 6
    %302 = vperm.xlu0 %301, %v17
    %v303 = vpop.permute.xlu0 %302
    %305 = vset.pattern.permute.xlu0 6
    %306 = vperm.xlu0 %305, %v18
    %v307 = vpop.permute.xlu0 %306
    %v309 = vperm.slane %v42, 2
    %v310 = vperm.slane %v38, 2
    %v311 = vperm.slane %v36, 2
    %v312 = vmul.f32 %v295, %v309
    %v313 = vmul.f32 %v295, %v310
    %v314 = vmul.f32 %v295, %v311
    %v315 = vmul.f32 %v299, %v309
    %v316 = vmul.f32 %v299, %v310
    %v317 = vmul.f32 %v299, %v311
    %v318 = vmul.f32 %v303, %v309
    %v319 = vmul.f32 %v303, %v310
    %v320 = vmul.f32 %v303, %v311
    %v321 = vmul.f32 %v307, %v309
    %v322 = vmul.f32 %v307, %v310
    %v323 = vmul.f32 %v307, %v311
    %v324 = vadd.f32 %v281, %v312
    %v325 = vadd.f32 %v282, %v313
    %v326 = vadd.f32 %v283, %v314
    %v327 = vadd.f32 %v284, %v315
    %v328 = vadd.f32 %v285, %v316
    %v329 = vadd.f32 %v286, %v317
    %v330 = vadd.f32 %v287, %v318
    %v331 = vadd.f32 %v288, %v319
    %v332 = vadd.f32 %v289, %v320
    %v333 = vadd.f32 %v290, %v321
    %v334 = vadd.f32 %v291, %v322
    %v335 = vadd.f32 %v292, %v323
    %336 = vset.pattern.permute.xlu0 7
    %337 = vperm.xlu0 %336, %v15
    %v338 = vpop.permute.xlu0 %337
    %340 = vset.pattern.permute.xlu0 7
    %341 = vperm.xlu0 %340, %v16
    %v342 = vpop.permute.xlu0 %341
    %344 = vset.pattern.permute.xlu0 7
    %345 = vperm.xlu0 %344, %v17
    %v346 = vpop.permute.xlu0 %345
    %348 = vset.pattern.permute.xlu0 7
    %349 = vperm.xlu0 %348, %v18
    %v350 = vpop.permute.xlu0 %349
    %v352 = vperm.slane %v42, 3
    %v353 = vperm.slane %v38, 3
    %v354 = vperm.slane %v36, 3
    %v355 = vmul.f32 %v338, %v352
    %v356 = vmul.f32 %v338, %v353
    %v357 = vmul.f32 %v338, %v354
    %v358 = vmul.f32 %v342, %v352
    %v359 = vmul.f32 %v342, %v353
    %v360 = vmul.f32 %v342, %v354
    %v361 = vmul.f32 %v346, %v352
    %v362 = vmul.f32 %v346, %v353
    %v363 = vmul.f32 %v346, %v354
    %v364 = vmul.f32 %v350, %v352
    %v365 = vmul.f32 %v350, %v353
    %v366 = vmul.f32 %v350, %v354
    %v367 = vadd.f32 %v324, %v355
    %v368 = vadd.f32 %v325, %v356
    %v369 = vadd.f32 %v326, %v357
    %v370 = vadd.f32 %v327, %v358
    %v371 = vadd.f32 %v328, %v359
    %v372 = vadd.f32 %v329, %v360
    %v373 = vadd.f32 %v330, %v361
    %v374 = vadd.f32 %v331, %v362
    %v375 = vadd.f32 %v332, %v363
    %v376 = vadd.f32 %v333, %v364
    %v377 = vadd.f32 %v334, %v365
    %v378 = vadd.f32 %v335, %v366
    %380 = vset.pattern.permute.xlu0 0
    %381 = vperm.xlu0 %380, %v19
    %v382 = vpop.permute.xlu0 %381
    %385 = vset.pattern.permute.xlu0 0
    %386 = vperm.xlu0 %385, %v20
    %v387 = vpop.permute.xlu0 %386
    %390 = vset.pattern.permute.xlu0 0
    %391 = vperm.xlu0 %390, %v21
    %v392 = vpop.permute.xlu0 %391
    %395 = vset.pattern.permute.xlu0 0
    %396 = vperm.xlu0 %395, %v22
    %v397 = vpop.permute.xlu0 %396
    %v399 = vadd.f32 %v367, %v382
    %v400 = vadd.f32 %v368, %v382
    %v401 = vadd.f32 %v369, %v382
    %v402 = vadd.f32 %v370, %v387
    %v403 = vadd.f32 %v371, %v387
    %v404 = vadd.f32 %v372, %v387
    %v405 = vadd.f32 %v373, %v392
    %v406 = vadd.f32 %v374, %v392
    %v407 = vadd.f32 %v375, %v392
    %v408 = vadd.f32 %v376, %v397
    %v409 = vadd.f32 %v377, %v397
    %v410 = vadd.f32 %v378, %v397
    %v411 = vmul.f32 %v399, 0.2
    %v412 = vmul.f32 %v400, 0.2
    %v413 = vmul.f32 %v401, 0.2
    %v414 = vmul.f32 %v402, 0.2
    %v415 = vmul.f32 %v403, 0.2
    %v416 = vmul.f32 %v404, 0.2
    %v417 = vmul.f32 %v405, 0.2
    %v418 = vmul.f32 %v406, 0.2
    %v419 = vmul.f32 %v407, 0.2
    %v420 = vmul.f32 %v408, 0.2
    %v421 = vmul.f32 %v409, 0.2
    %v422 = vmul.f32 %v410, 0.2
    %v423 = vmax.f32 %v399, %v411
    %v424 = vmax.f32 %v400, %v412
    %v425 = vmax.f32 %v401, %v413
    %v426 = vmax.f32 %v402, %v414
    %v427 = vmax.f32 %v403, %v415
    %v428 = vmax.f32 %v404, %v416
    %v429 = vmax.f32 %v405, %v417
    %v430 = vmax.f32 %v406, %v418
    %v431 = vmax.f32 %v407, %v419
    %v432 = vmax.f32 %v408, %v420
    %v433 = vmax.f32 %v409, %v421
    %v434 = vmax.f32 %v410, %v422
    %435 = vst [vmem:[#allocation2] sm:$0xff] %v423
    %436 = vst [vmem:[#allocation2 + $0x8] sm:$0xff] %v424
    %437 = vst.msk [vmem:[#allocation2 + $0x10] sm:$0xff] %vm37, %v425
    %438 = vst [vmem:[#allocation2 + $0x18] sm:$0xff] %v426
    %439 = vst [vmem:[#allocation2 + $0x20] sm:$0xff] %v427
    %440 = vst.msk [vmem:[#allocation2 + $0x28] sm:$0xff] %vm37, %v428
    %441 = vst [vmem:[#allocation2 + $0x30] sm:$0xff] %v429
    %442 = vst [vmem:[#allocation2 + $0x38] sm:$0xff] %v430
    %443 = vst.msk [vmem:[#allocation2 + $0x40] sm:$0xff] %vm37, %v431
    %444 = vst [vmem:[#allocation2 + $0x48] sm:$0xff] %v432
    %445 = vst [vmem:[#allocation2 + $0x50] sm:$0xff] %v433
    %446 = vst.msk [vmem:[#allocation2 + $0x58] sm:$0xff] %vm37, %v434
    %s447 = scalar_lea.vmem %s0, 8
    %v448 = vld [vmem:[%s447] sm:$0xff]
    %450 = vst [vmem:[#allocation1] ss:$2 sm:$0xff] %v448
    %v451 = vld.sshfl [vmem:[#allocation1] sm:$0xff pattern:$0x75316420]
    %v452 = vld.sshfl [vmem:[#allocation1 + $0x8] sm:$0xff pattern:$0x75316420]
    %455 = vst [vmem:[#allocation1] ss:$2 sm:$0xff] %v448
    %v456 = vld.sshfl [vmem:[#allocation1] sm:$0xff pattern:$0x75316420]
    %v457 = vld.sshfl [vmem:[#allocation1 + $0x8] sm:$0xff pattern:$0x75316420]
    %458 = vrot.lane.b32.xlu0 %v456, 16
    %v459 = vpop.permute.xlu0 %458
    %460 = vrot.lane.b32.xlu0 %v457, 16
    %v461 = vpop.permute.xlu0 %460
    %v462 = vsel %vm37, %v459, %v461
    %v466 = vsel %vm37, 0.0, %v459
    %v467 = vperm.slane %v451, 0
    %v468 = vperm.slane %v452, 0
    %v469 = vmul.f32 %v46, %v467
    %v470 = vmul.f32 %v46, %v468
    %v471 = vmul.f32 %v51, %v467
    %v472 = vmul.f32 %v51, %v468
    %v473 = vmul.f32 %v56, %v467
    %v474 = vmul.f32 %v56, %v468
    %v475 = vmul.f32 %v61, %v467
    %v476 = vmul.f32 %v61, %v468
    %v477 = vperm.slane %v451, 1
    %v478 = vperm.slane %v452, 1
    %v479 = vmul.f32 %v80, %v477
    %v480 = vmul.f32 %v80, %v478
    %v481 = vmul.f32 %v84, %v477
    %v482 = vmul.f32 %v84, %v478
    %v483 = vmul.f32 %v88, %v477
    %v484 = vmul.f32 %v88, %v478
    %v485 = vmul.f32 %v92, %v477
    %v486 = vmul.f32 %v92, %v478
    %v487 = vadd.f32 %v469, %v479
    %v488 = vadd.f32 %v470, %v480
    %v489 = vadd.f32 %v471, %v481
    %v490 = vadd.f32 %v472, %v482
    %v491 = vadd.f32 %v473, %v483
    %v492 = vadd.f32 %v474, %v484
    %v493 = vadd.f32 %v475, %v485
    %v494 = vadd.f32 %v476, %v486
    %v495 = vperm.slane %v451, 2
    %v496 = vperm.slane %v452, 2
    %v497 = vmul.f32 %v123, %v495
    %v498 = vmul.f32 %v123, %v496
    %v499 = vmul.f32 %v127, %v495
    %v500 = vmul.f32 %v127, %v496
    %v501 = vmul.f32 %v131, %v495
    %v502 = vmul.f32 %v131, %v496
    %v503 = vmul.f32 %v135, %v495
    %v504 = vmul.f32 %v135, %v496
    %v505 = vadd.f32 %v487, %v497
    %v506 = vadd.f32 %v488, %v498
    %v507 = vadd.f32 %v489, %v499
    %v508 = vadd.f32 %v490, %v500
    %v509 = vadd.f32 %v491, %v501
    %v510 = vadd.f32 %v492, %v502
    %v511 = vadd.f32 %v493, %v503
    %v512 = vadd.f32 %v494, %v504
    %v513 = vperm.slane %v451, 3
    %v514 = vperm.slane %v452, 3
    %v515 = vmul.f32 %v166, %v513
    %v516 = vmul.f32 %v166, %v514
    %v517 = vmul.f32 %v170, %v513
    %v518 = vmul.f32 %v170, %v514
    %v519 = vmul.f32 %v174, %v513
    %v520 = vmul.f32 %v174, %v514
    %v521 = vmul.f32 %v178, %v513
    %v522 = vmul.f32 %v178, %v514
    %v523 = vadd.f32 %v505, %v515
    %v524 = vadd.f32 %v506, %v516
    %v525 = vadd.f32 %v507, %v517
    %v526 = vadd.f32 %v508, %v518
    %v527 = vadd.f32 %v509, %v519
    %v528 = vadd.f32 %v510, %v520
    %v529 = vadd.f32 %v511, %v521
    %v530 = vadd.f32 %v512, %v522
    %v531 = vperm.slane %v466, 0
    %v532 = vperm.slane %v462, 0
    %v533 = vperm.slane %v461, 0
    %v534 = vmul.f32 %v209, %v531
    %v535 = vmul.f32 %v209, %v532
    %v536 = vmul.f32 %v209, %v533
    %v537 = vmul.f32 %v213, %v531
    %v538 = vmul.f32 %v213, %v532
    %v539 = vmul.f32 %v213, %v533
    %v540 = vmul.f32 %v217, %v531
    %v541 = vmul.f32 %v217, %v532
    %v542 = vmul.f32 %v217, %v533
    %v543 = vmul.f32 %v221, %v531
    %v544 = vmul.f32 %v221, %v532
    %v545 = vmul.f32 %v221, %v533
    %v546 = vadd.f32 %v523, %v534
    %v547 = vadd.f32 %v524, %v535
    %v548 = vadd.f32 %v197, %v536
    %v549 = vadd.f32 %v525, %v537
    %v550 = vadd.f32 %v526, %v538
    %v551 = vadd.f32 %v200, %v539
    %v552 = vadd.f32 %v527, %v540
    %v553 = vadd.f32 %v528, %v541
    %v554 = vadd.f32 %v203, %v542
    %v555 = vadd.f32 %v529, %v543
    %v556 = vadd.f32 %v530, %v544
    %v557 = vadd.f32 %v206, %v545
    %v558 = vperm.slane %v466, 1
    %v559 = vperm.slane %v462, 1
    %v560 = vperm.slane %v461, 1
    %v561 = vmul.f32 %v252, %v558
    %v562 = vmul.f32 %v252, %v559
    %v563 = vmul.f32 %v252, %v560
    %v564 = vmul.f32 %v256, %v558
    %v565 = vmul.f32 %v256, %v559
    %v566 = vmul.f32 %v256, %v560
    %v567 = vmul.f32 %v260, %v558
    %v568 = vmul.f32 %v260, %v559
    %v569 = vmul.f32 %v260, %v560
    %v570 = vmul.f32 %v264, %v558
    %v571 = vmul.f32 %v264, %v559
    %v572 = vmul.f32 %v264, %v560
    %v573 = vadd.f32 %v546, %v561
    %v574 = vadd.f32 %v547, %v562
    %v575 = vadd.f32 %v548, %v563
    %v576 = vadd.f32 %v549, %v564
    %v577 = vadd.f32 %v550, %v565
    %v578 = vadd.f32 %v551, %v566
    %v579 = vadd.f32 %v552, %v567
    %v580 = vadd.f32 %v553, %v568
    %v581 = vadd.f32 %v554, %v569
    %v582 = vadd.f32 %v555, %v570
    %v583 = vadd.f32 %v556, %v571
    %v584 = vadd.f32 %v557, %v572
    %v585 = vperm.slane %v466, 2
    %v586 = vperm.slane %v462, 2
    %v587 = vperm.slane %v461, 2
    %v588 = vmul.f32 %v295, %v585
    %v589 = vmul.f32 %v295, %v586
    %v590 = vmul.f32 %v295, %v587
    %v591 = vmul.f32 %v299, %v585
    %v592 = vmul.f32 %v299, %v586
    %v593 = vmul.f32 %v299, %v587
    %v594 = vmul.f32 %v303, %v585
    %v595 = vmul.f32 %v303, %v586
    %v596 = vmul.f32 %v303, %v587
    %v597 = vmul.f32 %v307, %v585
    %v598 = vmul.f32 %v307, %v586
    %v599 = vmul.f32 %v307, %v587
    %v600 = vadd.f32 %v573, %v588
    %v601 = vadd.f32 %v574, %v589
    %v602 = vadd.f32 %v575, %v590
    %v603 = vadd.f32 %v576, %v591
    %v604 = vadd.f32 %v577, %v592
    %v605 = vadd.f32 %v578, %v593
    %v606 = vadd.f32 %v579, %v594
    %v607 = vadd.f32 %v580, %v595
    %v608 = vadd.f32 %v581, %v596
    %v609 = vadd.f32 %v582, %v597
    %v610 = vadd.f32 %v583, %v598
    %v611 = vadd.f32 %v584, %v599
    %v612 = vperm.slane %v466, 3
    %v613 = vperm.slane %v462, 3
    %v614 = vperm.slane %v461, 3
    %v615 = vmul.f32 %v338, %v612
    %v616 = vmul.f32 %v338, %v613
    %v617 = vmul.f32 %v338, %v614
    %v618 = vmul.f32 %v342, %v612
    %v619 = vmul.f32 %v342, %v613
    %v620 = vmul.f32 %v342, %v614
    %v621 = vmul.f32 %v346, %v612
    %v622 = vmul.f32 %v346, %v613
    %v623 = vmul.f32 %v346, %v614
    %v624 = vmul.f32 %v350, %v612
    %v625 = vmul.f32 %v350, %v613
    %v626 = vmul.f32 %v350, %v614
    %v627 = vadd.f32 %v600, %v615
    %v628 = vadd.f32 %v601, %v616
    %v629 = vadd.f32 %v602, %v617
    %v630 = vadd.f32 %v603, %v618
    %v631 = vadd.f32 %v604, %v619
    %v632 = vadd.f32 %v605, %v620
    %v633 = vadd.f32 %v606, %v621
    %v634 = vadd.f32 %v607, %v622
    %v635 = vadd.f32 %v608, %v623
    %v636 = vadd.f32 %v609, %v624
    %v637 = vadd.f32 %v610, %v625
    %v638 = vadd.f32 %v611, %v626
    %v639 = vadd.f32 %v627, %v382
    %v640 = vadd.f32 %v628, %v382
    %v641 = vadd.f32 %v629, %v382
    %v642 = vadd.f32 %v630, %v387
    %v643 = vadd.f32 %v631, %v387
    %v644 = vadd.f32 %v632, %v387
    %v645 = vadd.f32 %v633, %v392
    %v646 = vadd.f32 %v634, %v392
    %v647 = vadd.f32 %v635, %v392
    %v648 = vadd.f32 %v636, %v397
    %v649 = vadd.f32 %v637, %v397
    %v650 = vadd.f32 %v638, %v397
    %v651 = vmul.f32 %v639, 0.2
    %v652 = vmul.f32 %v640, 0.2
    %v653 = vmul.f32 %v641, 0.2
    %v654 = vmul.f32 %v642, 0.2
    %v655 = vmul.f32 %v643, 0.2
    %v656 = vmul.f32 %v644, 0.2
    %v657 = vmul.f32 %v645, 0.2
    %v658 = vmul.f32 %v646, 0.2
    %v659 = vmul.f32 %v647, 0.2
    %v660 = vmul.f32 %v648, 0.2
    %v661 = vmul.f32 %v649, 0.2
    %v662 = vmul.f32 %v650, 0.2
    %v663 = vmax.f32 %v639, %v651
    %v664 = vmax.f32 %v640, %v652
    %v665 = vmax.f32 %v641, %v653
    %v666 = vmax.f32 %v642, %v654
    %v667 = vmax.f32 %v643, %v655
    %v668 = vmax.f32 %v644, %v656
    %v669 = vmax.f32 %v645, %v657
    %v670 = vmax.f32 %v646, %v658
    %v671 = vmax.f32 %v647, %v659
    %v672 = vmax.f32 %v648, %v660
    %v673 = vmax.f32 %v649, %v661
    %v674 = vmax.f32 %v650, %v662
    %s675 = scalar_lea.vmem [#allocation2], 96
    %676 = vst [vmem:[%s675] sm:$0xff] %v663
    %677 = vst [vmem:[%s675 + $0x8] sm:$0xff] %v664
    %678 = vst.msk [vmem:[%s675 + $0x10] sm:$0xff] %vm37, %v665
    %679 = vst [vmem:[%s675 + $0x18] sm:$0xff] %v666
    %680 = vst [vmem:[%s675 + $0x20] sm:$0xff] %v667
    %681 = vst.msk [vmem:[%s675 + $0x28] sm:$0xff] %vm37, %v668
    %682 = vst [vmem:[%s675 + $0x30] sm:$0xff] %v669
    %683 = vst [vmem:[%s675 + $0x38] sm:$0xff] %v670
    %684 = vst.msk [vmem:[%s675 + $0x40] sm:$0xff] %vm37, %v671
    %685 = vst [vmem:[%s675 + $0x48] sm:$0xff] %v672
    %686 = vst [vmem:[%s675 + $0x50] sm:$0xff] %v673
    %687 = vst.msk [vmem:[%s675 + $0x58] sm:$0xff] %vm37, %v674
    // Predicated region
    $region14: #{tpu_custom_call.1} parent=1 // pred_check
      _
    $region15: #{tpu_custom_call.1} parent=1 // pred_check_branch
      %689 = sbr.rel (0) target = $region17
    $region16: #{tpu_custom_call.1} parent=1 // pred_region
      %691 = vsyncadd [#allocation3], 0
      %s692 = sshll.u32 [#allocation2], 4
      %s693 = int_to_ptr.vmem [resolvable:$true] %s692
      %s694 = sshll.u32 %s3, 4
      %s695 = int_to_ptr.hbm [resolvable:$true] %s694
      %700 = dma.vmem_to_hbm [thread:$0]  %s693, 3072, %s695, [#allocation3], 384, 384, 24
    $region17: #{tpu_custom_call.1} parent=1 // pred_fallthru
      _
    // Predicated region
    $region18: #{tpu_custom_call.1} parent=1 // pred_check
      _
    $region19: #{tpu_custom_call.1} parent=1 // pred_check_branch
      %702 = sbr.rel (0) target = $region21
    $region20: #{tpu_custom_call.1} parent=1 // pred_region
      %704 = dma.done [#allocation3], 3072
    $region21: #{tpu_custom_call.1} parent=1 // pred_fallthru
      _
    %705 = vsyncpa [#allocation3], 1

</llo_original>
